<compile_context>
chip_gen: v5e
topology: v5e:2x2
jax: 0.10.0
libtpu: 0.0.40
codegen_flags: <defaults>
</compile_context>

<pallas_src>
import functools

import jax
import jax.numpy as jnp
from jax.experimental import pallas as pl
from jax.experimental.pallas import tpu as pltpu


# ---------------------------------------------------------------------------
# Helpers
# ---------------------------------------------------------------------------
def _round_up(x, m):
    return ((x + m - 1) // m) * m


def _pad2d(a, rows, cols):
    r, c = a.shape
    if r == rows and c == cols:      # early-return: pre-padded inputs cost nothing
        return a
    return jnp.pad(a, ((0, rows - r), (0, cols - c)))


def _vmem_limit_bytes():
    """Generation-aware scoped-VMEM budget.

    v5e/v6e have 128 MiB physical VMEM -> allow ~96 MiB; v7x has only 64 MiB
    per TensorCore -> cap at ~48 MiB.  Falls back to the conservative (v7x)
    number if the hardware query is unavailable.
    """
    phys = 64 * 1024 * 1024
    try:
        info = pltpu.get_tpu_info()
        phys = int(getattr(info, "vmem_capacity_bytes", phys))
    except Exception:
        pass
    return int(min((phys * 3) // 4, 96 * 1024 * 1024))


def _divisor_tiles(dim, max_tile):
    """Multiples of 128 that divide `dim`, largest first, capped at `max_tile`."""
    start = (min(max_tile, dim) // 128) * 128
    return [t for t in range(start, 0, -128) if dim % t == 0]


def _plan_tiles(m_p, k_p, f_p, a_ib, b_ib, o_ib, tile, budget):
    """Pick (tm, tk, tn) for C[m_p, f_p] = A[m_p, k_p] @ B[k_p, f_p].

    Preference order:
      1) tn = F_p and tk = K_p: B fully VMEM-resident (constant block index),
         A (the N^2 adjacency) streamed exactly once, C written once.
      2) tn = F_p, k tiled: A still read exactly once (no j axis); B is
         re-streamed once per row tile; C stays resident across k (accumulator).
      3) Generic 3-D tiling fallback (very large Fout).
    Row tiles prefer an even tile count so v7x's two TensorCores both get work
    on the 'parallel' i axis (no effect on single-TC v5e/v6e).
    """
    def footprint(tm, tk, tn):
        # Double-buffered A, B and (f32-accumulating) output blocks.
        return 2 * (tm * tk * a_ib + tk * tn * b_ib + tm * tn * o_ib)

    tm_opts = _divisor_tiles(m_p, tile)
    tm_even = [t for t in tm_opts if (m_p // t) % 2 == 0]
    tm_pref = tm_even + [t for t in tm_opts if t not in tm_even]

    for tm in tm_pref:                          # (1) B fully resident
        if footprint(tm, k_p, f_p) <= budget:
            return tm, k_p, f_p
    for tm in tm_pref:                          # (2) k-tiled, full-width output
        for tk in _divisor_tiles(k_p, tile):
            if footprint(tm, tk, f_p) <= budget:
                return tm, tk, f_p
    for tn in _divisor_tiles(f_p, tile):        # (3) generic fallback
        for tm in tm_pref:
            for tk in _divisor_tiles(k_p, tile):
                if footprint(tm, tk, tn) <= budget:
                    return tm, tk, tn
    return 128, 128, 128


# ---------------------------------------------------------------------------
# Fused tiled matmul kernel: C = A @ B (+ optional relu on the last k step).
# ---------------------------------------------------------------------------
def _matmul_kernel(a_ref, b_ref, o_ref, *, apply_relu):
    k = pl.program_id(2)

    @pl.when(k == 0)
    def _():
        o_ref[...] = jnp.zeros_like(o_ref)

    # f32 accumulation directly into the output block: its block index ignores
    # k, so it stays VMEM-resident across the reduction (no acc scratch, no
    # extra tile copy in the epilogue).
    o_ref[...] += jnp.dot(a_ref[...], b_ref[...],
                          preferred_element_type=jnp.float32)

    if apply_relu:
        @pl.when(k == pl.num_programs(2) - 1)
        def _():
            o_ref[...] = jnp.maximum(o_ref[...], 0.0)


def matmul_padded(a_p, b_p, *, apply_relu=False, tile=512):
    """C = A @ B (optionally relu-fused) on zero-padded operands.

    All dims must be multiples of 128.  Returns the full padded f32 product
    (callers slice once at the very end).
    """
    m_p, k_p = a_p.shape
    k_p2, f_p = b_p.shape
    assert k_p == k_p2, (a_p.shape, b_p.shape)
    assert m_p % 128 == 0 and k_p % 128 == 0 and f_p % 128 == 0

    vmem_limit = _vmem_limit_bytes()
    a_ib = jnp.dtype(a_p.dtype).itemsize
    b_ib = jnp.dtype(b_p.dtype).itemsize
    o_ib = jnp.dtype(jnp.float32).itemsize
    tm, tk, tn = _plan_tiles(m_p, k_p, f_p, a_ib, b_ib, o_ib, tile,
                             budget=int(vmem_limit * 0.6))

    grid = (m_p // tm, f_p // tn, k_p // tk)
    ni, nj, nk = grid

    # Advisory cost hint: A is re-read per output-column tile; B is re-read per
    # row tile unless it is fully resident (constant block index).
    b_reads = 1 if (nj == 1 and nk == 1) else ni
    cost = pl.CostEstimate(
        flops=2 * m_p * k_p * f_p,
        transcendentals=0,
        bytes_accessed=int(m_p * k_p * a_ib * nj
                           + k_p * f_p * b_ib * b_reads
                           + m_p * f_p * o_ib),
    )

    return pl.pallas_call(
        functools.partial(_matmul_kernel, apply_relu=apply_relu),
        out_shape=jax.ShapeDtypeStruct((m_p, f_p), jnp.float32),
        grid_spec=pltpu.PrefetchScalarGridSpec(
            num_scalar_prefetch=0,
            grid=grid,
            in_specs=[
                # A (adjacency): streamed (i, k) tiles.
                pl.BlockSpec((tm, tk), lambda i, j, k: (i, k)),
                # B (support): when tk==K_p and tn==F_p its block index is
                # constant, so Pallas DMAs it once and keeps it VMEM-resident.
                pl.BlockSpec((tk, tn), lambda i, j, k: (k, j)),
            ],
            out_specs=pl.BlockSpec((tm, tn), lambda i, j, k: (i, j)),
        ),
        compiler_params=pltpu.CompilerParams(
            dimension_semantics=("parallel", "parallel", "arbitrary"),
            vmem_limit_bytes=vmem_limit,
        ),
        cost_estimate=cost,
        # TODO(synk): add pipeline_mode=pl.Buffered(3) on the A spec only if a
        # profile shows exposed DMA at grid-step boundaries (costs VMEM on v7x).
    )(a_p, b_p)


# ---------------------------------------------------------------------------
# GraphConvolution forward:  act(adj @ (dropout(x) @ W)),  eval-mode dropout.
# ---------------------------------------------------------------------------
def prepare_adj(adj, *, n_padded=None, mxu_dtype=jnp.bfloat16):
    """Pad adj to a 128-multiple square and cast to the MXU input dtype.

    Do this ONCE outside the layer and reuse across layers / iterations: the
    jnp.pad of the N^2 operand is a full HBM read+write, comparable in cost to
    the kernel itself.  Already-prepared inputs pass through untouched.
    """
    n = adj.shape[0]
    n_p = n_padded if n_padded is not None else _round_up(n, 128)
    dt = jnp.dtype(mxu_dtype) if mxu_dtype is not None else jnp.dtype(jnp.float32)
    out = _pad2d(adj, n_p, n_p)
    if out.dtype != dt:
        out = out.astype(dt)
    return out


def graph_convolution(x, weight, adj, *, apply_relu=True,
                      adj_mxu_dtype=jnp.bfloat16, tile=512):
    """act(adj @ (dropout(x) @ W)) with eval-mode dropout (identity).

    x: (N, Fin) f32;  weight: (Fin, Fout) f32;  adj: (N, N) dense adjacency, or
    a `prepare_adj` output ((N_p, N_p), already padded & cast).
    adj_mxu_dtype: MXU input dtype for the dominant adj contraction.  bf16
      halves the dominant HBM read (f32 accumulation kept); pass None for full
      f32.  On v7x, jnp.float8_e4m3fn is a further option since adj is
      row-normalized in [0, 1] (v7x MXU has fp8, no int path).
    apply_relu: pygcn applies the activation per layer; the last layer of a GCN
      typically wants apply_relu=False (log_softmax applied by the caller).
    """
    n, fin = x.shape
    fin_w, fout = weight.shape
    assert fin == fin_w, (x.shape, weight.shape)
    assert adj.shape[0] == adj.shape[1], adj.shape

    # Accept a pre-padded adjacency and reuse its padding.
    n_adj = adj.shape[0]
    if n_adj >= n and n_adj % 128 == 0:
        n_p = n_adj
    else:
        assert n_adj == n, (adj.shape, n)
        n_p = _round_up(n, 128)
    f_p = _round_up(fout, 128)
    in_dtype = (jnp.dtype(adj_mxu_dtype) if adj_mxu_dtype is not None
                else jnp.dtype(jnp.float32))

    # --- dropout ------------------------------------------------------------
    # Eval-mode dropout == identity.
    # TODO(synk): training-mode dropout via pltpu.prng_seed + pltpu.stateful_bernoulli.

    # --- support = x @ W ------------------------------------------------------
    # O(N*Fin*Fout) work, negligible next to the O(N^2*Fout) adj contraction.
    # For small feature dims XLA's matmul beats a padded Pallas call (no 4-8x
    # padding waste, one fewer launch).
    x32 = x.astype(jnp.float32)
    w32 = weight.astype(jnp.float32)   # torch keeps f64; TPU MXU has no f64 path.
    if fin <= 512 and fout <= 512:
        support = jnp.dot(x32, w32, preferred_element_type=jnp.float32)
        support_p = _pad2d(support, n_p, f_p)
    else:
        fin_p = _round_up(fin, 128)
        support_p = matmul_padded(_pad2d(x32, n_p, fin_p),
                                  _pad2d(w32, fin_p, f_p),
                                  apply_relu=False, tile=tile)
    # Keep support PADDED and cast it exactly once to the adj-contraction input
    # dtype (no slice / re-pad / re-cast round trip between the two matmuls).
    if support_p.dtype != in_dtype:
        support_p = support_p.astype(in_dtype)

    # --- output = act(adj @ support) ------------------------------------------
    adj_p = prepare_adj(adj, n_padded=n_p, mxu_dtype=in_dtype)
    out_p = matmul_padded(adj_p, support_p, apply_relu=apply_relu, tile=tile)
    return out_p[:n, :fout]


def xavier_uniform(key, fan_in, fan_out, dtype=jnp.float32):
    bound = (6.0 / (fan_in + fan_out)) ** 0.5
    return jax.random.uniform(key, (fan_in, fan_out), dtype=dtype,
                              minval=-bound, maxval=bound)


if __name__ == "__main__":
    key = jax.random.PRNGKey(0)
    k_x, k_w, k_a = jax.random.split(key, 3)

    N = 16          # number of graph nodes
    IN_F = 32       # in_features
    OUT_F = 64      # out_features

    x = jax.random.normal(k_x, (N, IN_F), dtype=jnp.float32)
    weight = xavier_uniform(k_w, IN_F, OUT_F)

    # Symmetric, row-normalized dense adjacency (what spmm would multiply by).
    a = jax.random.uniform(k_a, (N, N), dtype=jnp.float32)
    a = (a + a.T) * 0.5 + jnp.eye(N, dtype=jnp.float32)
    adj = a / jnp.sum(a, axis=1, keepdims=True)

    # Pure-JAX reference (eval-mode dropout == identity).
    ref = jnp.maximum(adj @ (x @ weight), 0.0)

    # f32 MXU-input path (tolerance also covers TPU default matmul-precision
    # differences between the kernel and the jnp reference).
    out_f32 = graph_convolution(x, weight, adj, adj_mxu_dtype=None)
    out_f32 = jax.block_until_ready(out_f32)
    assert out_f32.shape == (N, OUT_F)
    assert jnp.allclose(out_f32, ref, atol=5e-3, rtol=5e-3), float(
        jnp.max(jnp.abs(out_f32 - ref)))

    # Default path: bf16 adj / support MXU inputs, f32 accumulation (halves the
    # dominant adj HBM read; accepted precision tradeoff).
    out_bf16 = graph_convolution(x, weight, adj)
    out_bf16 = jax.block_until_ready(out_bf16)
    assert out_bf16.shape == (N, OUT_F)
    assert jnp.allclose(out_bf16, ref, atol=5e-2, rtol=5e-2), float(
        jnp.max(jnp.abs(out_bf16 - ref)))

    # Pre-padded / pre-cast adjacency reused across layers hits the _pad2d
    # early-return: no per-call HBM pad pass over the N^2 operand.
    adj_prepared = prepare_adj(adj)
    out_prep = graph_convolution(x, weight, adj_prepared)
    out_prep = jax.block_until_ready(out_prep)
    assert out_prep.shape == (N, OUT_F)
    assert jnp.allclose(out_prep, out_bf16, atol=1e-6, rtol=1e-6)

    print("KERNEL_OK")
</pallas_src>

<mosaic_0001>
module attributes {stable_mosaic.version = 11 : i64} {
  func.func @_matmul_kernel(%arg0: i32, %arg1: i32, %arg2: i32, %arg3: memref<128x128xf32, #tpu.memory_space<vmem>>, %arg4: memref<128x128xf32, #tpu.memory_space<vmem>>, %arg5: memref<128x128xf32, #tpu.memory_space<vmem>>) attributes {dimension_semantics = [#tpu.dimension_semantics<parallel>, #tpu.dimension_semantics<parallel>, #tpu.dimension_semantics<arbitrary>], iteration_bounds = array<i64: 1, 1, 1>, scalar_prefetch = 0 : i64, scratch_operands = 0 : i64, tpu.core_type = #tpu.core_type<tc>, window_params = [{transform_indices = @transform_0, window_bounds = array<i64: 128, 128>}, {transform_indices = @transform_1, window_bounds = array<i64: 128, 128>}, {transform_indices = @transform_2, window_bounds = array<i64: 128, 128>}]} {
    %c0_i32 = arith.constant 0 : i32
    %0 = arith.cmpi eq, %arg2, %c0_i32 : i32
    %1 = arith.extui %0 : i1 to i32
    %c0_i32_0 = arith.constant 0 : i32
    %2 = arith.cmpi ne, %1, %c0_i32_0 : i32
    scf.if %2 {
      %cst_10 = arith.constant 0.000000e+00 : f32
      %12 = vector.broadcast %cst_10 : f32 to vector<128x128xf32>
      %c0_11 = arith.constant 0 : index
      %c0_12 = arith.constant 0 : index
      %13 = vector.load %arg5[%c0_11, %c0_12] : memref<128x128xf32, #tpu.memory_space<vmem>>, vector<128x128xf32>
      tpu.vector_store %arg5[%c0_11, %c0_12], %12 {strides = array<i32>} : memref<128x128xf32, #tpu.memory_space<vmem>>, vector<128x128xf32>,
    } else {
    }
    %c0 = arith.constant 0 : index
    %c0_1 = arith.constant 0 : index
    %3 = vector.load %arg5[%c0, %c0_1] : memref<128x128xf32, #tpu.memory_space<vmem>>, vector<128x128xf32>
    %c0_2 = arith.constant 0 : index
    %c0_3 = arith.constant 0 : index
    %4 = vector.load %arg3[%c0_2, %c0_3] : memref<128x128xf32, #tpu.memory_space<vmem>>, vector<128x128xf32>
    %c0_4 = arith.constant 0 : index
    %c0_5 = arith.constant 0 : index
    %5 = vector.load %arg4[%c0_4, %c0_5] : memref<128x128xf32, #tpu.memory_space<vmem>>, vector<128x128xf32>
    %cst = arith.constant dense<0.000000e+00> : vector<128x128xf32>
    %6 = tpu.matmul %4, %5, %cst {dimension_numbers = #tpu.dot_dimension_numbers<[1], [0], [0], [1], [0, 0, 1, 1], [], []>} : vector<128x128xf32>, vector<128x128xf32>, vector<128x128xf32> -> vector<128x128xf32>
    %7 = arith.addf %3, %6 : vector<128x128xf32>
    %c0_6 = arith.constant 0 : index
    %c0_7 = arith.constant 0 : index
    %8 = vector.load %arg5[%c0_6, %c0_7] : memref<128x128xf32, #tpu.memory_space<vmem>>, vector<128x128xf32>
    tpu.vector_store %arg5[%c0_6, %c0_7], %7 {strides = array<i32>} : memref<128x128xf32, #tpu.memory_space<vmem>>, vector<128x128xf32>,
    %c0_i32_8 = arith.constant 0 : i32
    %9 = arith.cmpi eq, %arg2, %c0_i32_8 : i32
    %10 = arith.extui %9 : i1 to i32
    %c0_i32_9 = arith.constant 0 : i32
    %11 = arith.cmpi ne, %10, %c0_i32_9 : i32
    scf.if %11 {
      %c0_10 = arith.constant 0 : index
      %c0_11 = arith.constant 0 : index
      %12 = vector.load %arg5[%c0_10, %c0_11] : memref<128x128xf32, #tpu.memory_space<vmem>>, vector<128x128xf32>
      %cst_12 = arith.constant 0.000000e+00 : f32
      %13 = vector.broadcast %cst_12 : f32 to vector<128x128xf32>
      %14 = arith.maximumf %12, %13 : vector<128x128xf32>
      %c0_13 = arith.constant 0 : index
      %c0_14 = arith.constant 0 : index
      %15 = vector.load %arg5[%c0_13, %c0_14] : memref<128x128xf32, #tpu.memory_space<vmem>>, vector<128x128xf32>
      tpu.vector_store %arg5[%c0_13, %c0_14], %14 {strides = array<i32>} : memref<128x128xf32, #tpu.memory_space<vmem>>, vector<128x128xf32>,
    } else {
    }
    return
  }
  func.func @transform_0(%arg0: i32, %arg1: i32, %arg2: i32) -> (i32, i32) {
    %c0_i32 = arith.constant 0 : i32
    return %arg0, %arg2 : i32, i32
  }
  func.func @transform_1(%arg0: i32, %arg1: i32, %arg2: i32) -> (i32, i32) {
    %c0_i32 = arith.constant 0 : i32
    return %arg2, %arg1 : i32, i32
  }
  func.func @transform_2(%arg0: i32, %arg1: i32, %arg2: i32) -> (i32, i32) {
    %c0_i32 = arith.constant 0 : i32
    return %arg0, %arg1 : i32, i32
  }
}

</mosaic_0001>

<llo_original>
// kernel: tpu_custom_call.1
$region0: #{tpu_custom_call.1}
  #allocation0 [shape = 'u32[]', space=smem, size = 0x4, offset = 0x4, fixed_abs, tag = 'smem constant byte address 0x4 - core index']
  #allocation1 [shape = 'u32[72,128]{1,0:T(1,128)}', space=vmem, size = 0x9000, scoped, tag = 'internal scratch']
  %s0 = inlined_call_operand.hbm [shape: f32[128,128], index: 0, kind: input, shape index: {}]
  %s1 = inlined_call_operand.hbm [shape: f32[128,128], index: 1, kind: input, shape index: {}]
  %s2 = inlined_call_operand.hbm [shape: f32[128,128], index: 2, kind: output, shape index: {}]
  %s3 = sld [smem:[#allocation0]]
  $region34: #{tpu_custom_call.1} parent=0
    _
  %s5 = ssub.s32 1, %s3
  %s6 = scalar_select 0, %s5, %s3
  $region1: #{tpu_custom_call.1} parent=0
    #allocation2 [shape = 'u8[65536]{0}', space=vmem, size = 0x10000, scoped, tag = 'input window, operand 0, single buffered']
    #allocation3 [shape = 's32[1]{0}', space=sflag, size = 0x4, scoped, tag = 'scoped memory for tpu_custom_call.1']
    #allocation4 [shape = 's32[1]{0}', space=sflag, size = 0x4, scoped, tag = 'scoped memory for tpu_custom_call.1']
    #allocation5 [shape = 'u8[65536]{0}', space=vmem, size = 0x10000, scoped, tag = 'input window, operand 1, single buffered']
    #allocation6 [shape = 's32[1]{0}', space=sflag, size = 0x4, scoped, tag = 'scoped memory for tpu_custom_call.1']
    #allocation7 [shape = 'u8[65536]{0}', space=vmem, size = 0x10000, scoped, tag = 'output window, operand 0, single buffered']
    %7 = vsyncpa [#allocation3], 0
    %8 = vsyncpa [#allocation6], 0
    %9 = vsyncpa [#allocation4], 0
    // Predicated region
    $region2: #{tpu_custom_call.1} parent=1 // pred_check
      _
    $region3: #{tpu_custom_call.1} parent=1 // pred_check_branch
      %11 = sbr.rel (0) target = $region5
    $region4: #{tpu_custom_call.1} parent=1 // pred_region
      %13 = vsyncadd [#allocation3], 0
      %s14 = sshll.u32 %s0, 4
      %s15 = int_to_ptr.hbm [resolvable:$true] %s14
      %s16 = sshll.u32 [#allocation2], 4
      %s17 = int_to_ptr.vmem [resolvable:$true] %s16
      %22 = dma.hbm_to_vmem [thread:$0]  %s15, 2048, %s17, [#allocation3], 128, 128, 8
    $region5: #{tpu_custom_call.1} parent=1 // pred_fallthru
      _
    // Predicated region
    $region6: #{tpu_custom_call.1} parent=1 // pred_check
      _
    $region7: #{tpu_custom_call.1} parent=1 // pred_check_branch
      %24 = sbr.rel (0) target = $region9
    $region8: #{tpu_custom_call.1} parent=1 // pred_region
      %26 = vsyncadd [#allocation6], 0
      %s27 = sshll.u32 %s1, 4
      %s28 = int_to_ptr.hbm [resolvable:$true] %s27
      %s29 = sshll.u32 [#allocation5], 4
      %s30 = int_to_ptr.vmem [resolvable:$true] %s29
      %35 = dma.hbm_to_vmem [thread:$0]  %s28, 2048, %s30, [#allocation6], 128, 128, 8
    $region9: #{tpu_custom_call.1} parent=1 // pred_fallthru
      _
    // Predicated region
    $region10: #{tpu_custom_call.1} parent=1 // pred_check
      _
    $region11: #{tpu_custom_call.1} parent=1 // pred_check_branch
      %37 = sbr.rel (0) target = $region13
    $region12: #{tpu_custom_call.1} parent=1 // pred_region
      %39 = dma.done [#allocation3], 2048
    $region13: #{tpu_custom_call.1} parent=1 // pred_fallthru
      _
    // Predicated region
    $region14: #{tpu_custom_call.1} parent=1 // pred_check
      _
    $region15: #{tpu_custom_call.1} parent=1 // pred_check_branch
      %41 = sbr.rel (0) target = $region17
    $region16: #{tpu_custom_call.1} parent=1 // pred_region
      %43 = dma.done [#allocation6], 2048
    $region17: #{tpu_custom_call.1} parent=1 // pred_fallthru
      _
    %p44 = scmp.eq.s32.totalorder 0, 0
    // Predicated region
    $region18: #{tpu_custom_call.1} parent=1 // pred_check
      %p45 = pneg %p44
    $region19: #{tpu_custom_call.1} parent=1 // pred_check_branch
      %47 = sbr.rel (%p45) target = $region21
    $region20: #{tpu_custom_call.1} parent=1 // pred_region
      %48 = vst [vmem:[#allocation7] sm:$0xff] 0.0
      %49 = vst [vmem:[#allocation7 + $0x8] sm:$0xff] 0.0
      %50 = vst [vmem:[#allocation7 + $0x10] sm:$0xff] 0.0
      %51 = vst [vmem:[#allocation7 + $0x18] sm:$0xff] 0.0
      %52 = vst [vmem:[#allocation7 + $0x20] sm:$0xff] 0.0
      %53 = vst [vmem:[#allocation7 + $0x28] sm:$0xff] 0.0
      %54 = vst [vmem:[#allocation7 + $0x30] sm:$0xff] 0.0
      %55 = vst [vmem:[#allocation7 + $0x38] sm:$0xff] 0.0
      %56 = vst [vmem:[#allocation7 + $0x40] sm:$0xff] 0.0
      %57 = vst [vmem:[#allocation7 + $0x48] sm:$0xff] 0.0
      %58 = vst [vmem:[#allocation7 + $0x50] sm:$0xff] 0.0
      %59 = vst [vmem:[#allocation7 + $0x58] sm:$0xff] 0.0
      %60 = vst [vmem:[#allocation7 + $0x60] sm:$0xff] 0.0
      %61 = vst [vmem:[#allocation7 + $0x68] sm:$0xff] 0.0
      %62 = vst [vmem:[#allocation7 + $0x70] sm:$0xff] 0.0
      %63 = vst [vmem:[#allocation7 + $0x78] sm:$0xff] 0.0
    $region21: #{tpu_custom_call.1} parent=1 // pred_fallthru
      _
    %v64 = vld [vmem:[#allocation7] sm:$0xff]
    %v65 = vld [vmem:[#allocation7 + $0x8] sm:$0xff]
    %v66 = vld [vmem:[#allocation7 + $0x10] sm:$0xff]
    %v67 = vld [vmem:[#allocation7 + $0x18] sm:$0xff]
    %v68 = vld [vmem:[#allocation7 + $0x20] sm:$0xff]
    %v69 = vld [vmem:[#allocation7 + $0x28] sm:$0xff]
    %v70 = vld [vmem:[#allocation7 + $0x30] sm:$0xff]
    %v71 = vld [vmem:[#allocation7 + $0x38] sm:$0xff]
    %v72 = vld [vmem:[#allocation7 + $0x40] sm:$0xff]
    %v73 = vld [vmem:[#allocation7 + $0x48] sm:$0xff]
    %v74 = vld [vmem:[#allocation7 + $0x50] sm:$0xff]
    %v75 = vld [vmem:[#allocation7 + $0x58] sm:$0xff]
    %v76 = vld [vmem:[#allocation7 + $0x60] sm:$0xff]
    %v77 = vld [vmem:[#allocation7 + $0x68] sm:$0xff]
    %v78 = vld [vmem:[#allocation7 + $0x70] sm:$0xff]
    %v79 = vld [vmem:[#allocation7 + $0x78] sm:$0xff]
    %v80 = vld [vmem:[#allocation2] sm:$0xff]
    %v81 = vld [vmem:[#allocation2 + $0x8] sm:$0xff]
    %v82 = vld [vmem:[#allocation2 + $0x10] sm:$0xff]
    %v83 = vld [vmem:[#allocation2 + $0x18] sm:$0xff]
    %v84 = vld [vmem:[#allocation2 + $0x20] sm:$0xff]
    %v85 = vld [vmem:[#allocation2 + $0x28] sm:$0xff]
    %v86 = vld [vmem:[#allocation2 + $0x30] sm:$0xff]
    %v87 = vld [vmem:[#allocation2 + $0x38] sm:$0xff]
    %v88 = vld [vmem:[#allocation2 + $0x40] sm:$0xff]
    %v89 = vld [vmem:[#allocation2 + $0x48] sm:$0xff]
    %v90 = vld [vmem:[#allocation2 + $0x50] sm:$0xff]
    %v91 = vld [vmem:[#allocation2 + $0x58] sm:$0xff]
    %v92 = vld [vmem:[#allocation2 + $0x60] sm:$0xff]
    %v93 = vld [vmem:[#allocation2 + $0x68] sm:$0xff]
    %v94 = vld [vmem:[#allocation2 + $0x70] sm:$0xff]
    %v95 = vld [vmem:[#allocation2 + $0x78] sm:$0xff]
    %v96 = vld [vmem:[#allocation5] sm:$0xff]
    %v97 = vld [vmem:[#allocation5 + $0x8] sm:$0xff]
    %v98 = vld [vmem:[#allocation5 + $0x10] sm:$0xff]
    %v99 = vld [vmem:[#allocation5 + $0x18] sm:$0xff]
    %v100 = vld [vmem:[#allocation5 + $0x20] sm:$0xff]
    %v101 = vld [vmem:[#allocation5 + $0x28] sm:$0xff]
    %v102 = vld [vmem:[#allocation5 + $0x30] sm:$0xff]
    %v103 = vld [vmem:[#allocation5 + $0x38] sm:$0xff]
    %v104 = vld [vmem:[#allocation5 + $0x40] sm:$0xff]
    %v105 = vld [vmem:[#allocation5 + $0x48] sm:$0xff]
    %v106 = vld [vmem:[#allocation5 + $0x50] sm:$0xff]
    %v107 = vld [vmem:[#allocation5 + $0x58] sm:$0xff]
    %v108 = vld [vmem:[#allocation5 + $0x60] sm:$0xff]
    %v109 = vld [vmem:[#allocation5 + $0x68] sm:$0xff]
    %v110 = vld [vmem:[#allocation5 + $0x70] sm:$0xff]
    %v111 = vld [vmem:[#allocation5 + $0x78] sm:$0xff]
    %112 = vmatpush.msra.mxu0 %v111
    %113 = vmatpush.msra.mxu0 %v110
    %114 = vmatpush.msra.mxu0 %v109
    %115 = vmatpush.msra.mxu0 %v108
    %116 = vmatpush.msra.mxu0 %v107
    %117 = vmatpush.msra.mxu0 %v106
    %118 = vmatpush.msra.mxu0 %v105
    %119 = vmatpush.msra.mxu0 %v104
    %120 = vmatpush.msra.mxu0 %v103
    %121 = vmatpush.msra.mxu0 %v102
    %122 = vmatpush.msra.mxu0 %v101
    %123 = vmatpush.msra.mxu0 %v100
    %124 = vmatpush.msra.mxu0 %v99
    %125 = vmatpush.msra.mxu0 %v98
    %126 = vmatpush.msra.mxu0 %v97
    %127 = vmatpush.msra.mxu0 %v96
    %128 = vmatmul.f32.gmra.mxu0 %v80
    %v129 = vpop.f32.mrf.mxu0
    %v130 = vadd.f32 0.0, %v129
    %131 = vmatmul.f32.gmra.mxu0 %v81
    %v132 = vpop.f32.mrf.mxu0
    %v133 = vadd.f32 0.0, %v132
    %134 = vmatmul.f32.gmra.mxu0 %v82
    %v135 = vpop.f32.mrf.mxu0
    %v136 = vadd.f32 0.0, %v135
    %137 = vmatmul.f32.gmra.mxu0 %v83
    %v138 = vpop.f32.mrf.mxu0
    %v139 = vadd.f32 0.0, %v138
    %140 = vmatmul.f32.gmra.mxu0 %v84
    %v141 = vpop.f32.mrf.mxu0
    %v142 = vadd.f32 0.0, %v141
    %143 = vmatmul.f32.gmra.mxu0 %v85
    %v144 = vpop.f32.mrf.mxu0
    %v145 = vadd.f32 0.0, %v144
    %146 = vmatmul.f32.gmra.mxu0 %v86
    %v147 = vpop.f32.mrf.mxu0
    %v148 = vadd.f32 0.0, %v147
    %149 = vmatmul.f32.gmra.mxu0 %v87
    %v150 = vpop.f32.mrf.mxu0
    %v151 = vadd.f32 0.0, %v150
    %152 = vmatmul.f32.gmra.mxu0 %v88
    %v153 = vpop.f32.mrf.mxu0
    %v154 = vadd.f32 0.0, %v153
    %155 = vmatmul.f32.gmra.mxu0 %v89
    %v156 = vpop.f32.mrf.mxu0
    %v157 = vadd.f32 0.0, %v156
    %158 = vmatmul.f32.gmra.mxu0 %v90
    %v159 = vpop.f32.mrf.mxu0
    %v160 = vadd.f32 0.0, %v159
    %161 = vmatmul.f32.gmra.mxu0 %v91
    %v162 = vpop.f32.mrf.mxu0
    %v163 = vadd.f32 0.0, %v162
    %164 = vmatmul.f32.gmra.mxu0 %v92
    %v165 = vpop.f32.mrf.mxu0
    %v166 = vadd.f32 0.0, %v165
    %167 = vmatmul.f32.gmra.mxu0 %v93
    %v168 = vpop.f32.mrf.mxu0
    %v169 = vadd.f32 0.0, %v168
    %170 = vmatmul.f32.gmra.mxu0 %v94
    %v171 = vpop.f32.mrf.mxu0
    %v172 = vadd.f32 0.0, %v171
    %173 = vmatmul.f32.gmra.mxu0 %v95
    %v174 = vpop.f32.mrf.mxu0
    %v175 = vadd.f32 0.0, %v174
    %176 = vdwg.mxu0
    %v177 = vadd.f32 %v64, %v130
    %v178 = vadd.f32 %v65, %v133
    %v179 = vadd.f32 %v66, %v136
    %v180 = vadd.f32 %v67, %v139
    %v181 = vadd.f32 %v68, %v142
    %v182 = vadd.f32 %v69, %v145
    %v183 = vadd.f32 %v70, %v148
    %v184 = vadd.f32 %v71, %v151
    %v185 = vadd.f32 %v72, %v154
    %v186 = vadd.f32 %v73, %v157
    %v187 = vadd.f32 %v74, %v160
    %v188 = vadd.f32 %v75, %v163
    %v189 = vadd.f32 %v76, %v166
    %v190 = vadd.f32 %v77, %v169
    %v191 = vadd.f32 %v78, %v172
    %v192 = vadd.f32 %v79, %v175
    %193 = vst [vmem:[#allocation7] sm:$0xff] %v177
    %194 = vst [vmem:[#allocation7 + $0x8] sm:$0xff] %v178
    %195 = vst [vmem:[#allocation7 + $0x10] sm:$0xff] %v179
    %196 = vst [vmem:[#allocation7 + $0x18] sm:$0xff] %v180
    %197 = vst [vmem:[#allocation7 + $0x20] sm:$0xff] %v181
    %198 = vst [vmem:[#allocation7 + $0x28] sm:$0xff] %v182
    %199 = vst [vmem:[#allocation7 + $0x30] sm:$0xff] %v183
    %200 = vst [vmem:[#allocation7 + $0x38] sm:$0xff] %v184
    %201 = vst [vmem:[#allocation7 + $0x40] sm:$0xff] %v185
    %202 = vst [vmem:[#allocation7 + $0x48] sm:$0xff] %v186
    %203 = vst [vmem:[#allocation7 + $0x50] sm:$0xff] %v187
    %204 = vst [vmem:[#allocation7 + $0x58] sm:$0xff] %v188
    %205 = vst [vmem:[#allocation7 + $0x60] sm:$0xff] %v189
    %206 = vst [vmem:[#allocation7 + $0x68] sm:$0xff] %v190
    %207 = vst [vmem:[#allocation7 + $0x70] sm:$0xff] %v191
    %208 = vst [vmem:[#allocation7 + $0x78] sm:$0xff] %v192
    // Predicated region
    $region22: #{tpu_custom_call.1} parent=1 // pred_check
      %p209 = pneg %p44
    $region23: #{tpu_custom_call.1} parent=1 // pred_check_branch
      %211 = sbr.rel (%p209) target = $region25
    $region24: #{tpu_custom_call.1} parent=1 // pred_region
      %v212 = vld [vmem:[#allocation7] sm:$0xff]
      %v213 = vld [vmem:[#allocation7 + $0x8] sm:$0xff]
      %v214 = vld [vmem:[#allocation7 + $0x10] sm:$0xff]
      %v215 = vld [vmem:[#allocation7 + $0x18] sm:$0xff]
      %v216 = vld [vmem:[#allocation7 + $0x20] sm:$0xff]
      %v217 = vld [vmem:[#allocation7 + $0x28] sm:$0xff]
      %v218 = vld [vmem:[#allocation7 + $0x30] sm:$0xff]
      %v219 = vld [vmem:[#allocation7 + $0x38] sm:$0xff]
      %v220 = vld [vmem:[#allocation7 + $0x40] sm:$0xff]
      %v221 = vld [vmem:[#allocation7 + $0x48] sm:$0xff]
      %v222 = vld [vmem:[#allocation7 + $0x50] sm:$0xff]
      %v223 = vld [vmem:[#allocation7 + $0x58] sm:$0xff]
      %v224 = vld [vmem:[#allocation7 + $0x60] sm:$0xff]
      %v225 = vld [vmem:[#allocation7 + $0x68] sm:$0xff]
      %v226 = vld [vmem:[#allocation7 + $0x70] sm:$0xff]
      %v227 = vld [vmem:[#allocation7 + $0x78] sm:$0xff]
      %v228 = vmax.f32 %v212, 0.0
      %v229 = vmax.f32 %v213, 0.0
      %v230 = vmax.f32 %v214, 0.0
      %v231 = vmax.f32 %v215, 0.0
      %v232 = vmax.f32 %v216, 0.0
      %v233 = vmax.f32 %v217, 0.0
      %v234 = vmax.f32 %v218, 0.0
      %v235 = vmax.f32 %v219, 0.0
      %v236 = vmax.f32 %v220, 0.0
      %v237 = vmax.f32 %v221, 0.0
      %v238 = vmax.f32 %v222, 0.0
      %v239 = vmax.f32 %v223, 0.0
      %v240 = vmax.f32 %v224, 0.0
      %v241 = vmax.f32 %v225, 0.0
      %v242 = vmax.f32 %v226, 0.0
      %v243 = vmax.f32 %v227, 0.0
      %244 = vst [vmem:[#allocation7] sm:$0xff] %v228
      %245 = vst [vmem:[#allocation7 + $0x8] sm:$0xff] %v229
      %246 = vst [vmem:[#allocation7 + $0x10] sm:$0xff] %v230
      %247 = vst [vmem:[#allocation7 + $0x18] sm:$0xff] %v231
      %248 = vst [vmem:[#allocation7 + $0x20] sm:$0xff] %v232
      %249 = vst [vmem:[#allocation7 + $0x28] sm:$0xff] %v233
      %250 = vst [vmem:[#allocation7 + $0x30] sm:$0xff] %v234
      %251 = vst [vmem:[#allocation7 + $0x38] sm:$0xff] %v235
      %252 = vst [vmem:[#allocation7 + $0x40] sm:$0xff] %v236
      %253 = vst [vmem:[#allocation7 + $0x48] sm:$0xff] %v237
      %254 = vst [vmem:[#allocation7 + $0x50] sm:$0xff] %v238
      %255 = vst [vmem:[#allocation7 + $0x58] sm:$0xff] %v239
      %256 = vst [vmem:[#allocation7 + $0x60] sm:$0xff] %v240
      %257 = vst [vmem:[#allocation7 + $0x68] sm:$0xff] %v241
      %258 = vst [vmem:[#allocation7 + $0x70] sm:$0xff] %v242
      %259 = vst [vmem:[#allocation7 + $0x78] sm:$0xff] %v243
    $region25: #{tpu_custom_call.1} parent=1 // pred_fallthru
      _
    // Predicated region
    $region26: #{tpu_custom_call.1} parent=1 // pred_check
      _
    $region27: #{tpu_custom_call.1} parent=1 // pred_check_branch
      %261 = sbr.rel (0) target = $region29
    $region28: #{tpu_custom_call.1} parent=1 // pred_region
      %263 = vsyncadd [#allocation4], 0
      %s264 = sshll.u32 [#allocation7], 4
      %s265 = int_to_ptr.vmem [resolvable:$true] %s264
      %s266 = sshll.u32 %s2, 4
      %s267 = int_to_ptr.hbm [resolvable:$true] %s266
      %272 = dma.vmem_to_hbm [thread:$0]  %s265, 2048, %s267, [#allocation4], 128, 128, 8
    $region29: #{tpu_custom_call.1} parent=1 // pred_fallthru
      _
    // Predicated region
    $region30: #{tpu_custom_call.1} parent=1 // pred_check
      _
    $region31: #{tpu_custom_call.1} parent=1 // pred_check_branch
      %274 = sbr.rel (0) target = $region33
    $region32: #{tpu_custom_call.1} parent=1 // pred_region
      %276 = dma.done [#allocation4], 2048
    $region33: #{tpu_custom_call.1} parent=1 // pred_fallthru
      _
    %277 = vsyncpa [#allocation3], 1
    %278 = vsyncpa [#allocation6], 1
    %279 = vsyncpa [#allocation4], 1

</llo_original>
